<compile_context>
chip_gen: v7x
topology: tpu7x:2x2x1
jax: 0.10.0
libtpu: 0.0.40
codegen_flags: <defaults>
</compile_context>

<pallas_src>
import math
import functools

import jax
import jax.numpy as jnp
from jax.experimental import pallas as pl
from jax.experimental.pallas import tpu as pltpu


# ----------------------------- small helpers ----------------------------------------
@functools.lru_cache(maxsize=None)
def _vmem_limit_bytes():
    try:
        cap = int(pltpu.get_tpu_info().vmem_capacity_bytes)
    except Exception:
        cap = 128 * 1024 * 1024
    if cap <= 64 * 1024 * 1024:          # v7x-class parts: leave headroom under 64 MiB
        return 48 * 1024 * 1024
    return min(64 * 1024 * 1024, cap // 2)


def _round_up(x, m):
    return ((x + m - 1) // m) * m


def _pick_tile(dim, target):
    """Largest lane-friendly tile <= target that divides dim exactly, else the full dim."""
    if dim <= target:
        return dim
    for t in range(target, 127, -128):  # multiples of 128 (also multiples of 8)
        if dim % t == 0:
            return t
    return dim


def _pad_rows(x, rows):
    """Pad the leading (row) dim of a 2-D array up to `rows`."""
    if x.shape[0] == rows:
        return x
    return jnp.pad(x, ((0, rows - x.shape[0]), (0, 0)))


def _gelu_tanh(x):
    c = math.sqrt(2.0 / math.pi)
    return 0.5 * x * (1.0 + jnp.tanh(c * (x + 0.044715 * x * x * x)))


def _rotate_roll(t, half):
    # rotate_half(t) == sign ⊙ roll(t, half); the sign vector is folded into sin.
    if (2 * half) % 256 == 0:
        # real head_dim (e.g. 256): halves are vreg-aligned -> cheap XLU lane rotate.
        return pltpu.roll(t, shift=half, axis=1)
    # small head_dim fallback (toy config): aligned static slices + concat.
    return jnp.concatenate([t[:, half:], t[:, :half]], axis=1)


# ----------------------------- tiled matmul kernel -----------------------------------
def _matmul_kernel(*refs, has_bias, has_res):
    x_ref, w_ref = refs[0], refs[1]
    pos = 2
    b_ref = refs[pos] if has_bias else None
    pos += int(has_bias)
    r_ref = refs[pos] if has_res else None
    pos += int(has_res)
    o_ref, acc_ref = refs[pos], refs[pos + 1]

    kk = pl.program_id(2)

    @pl.when(kk == 0)
    def _():
        acc_ref[...] = jnp.zeros_like(acc_ref)

    # bf16 weights, bf16 activations on the MXU, f32 accumulation.
    acc_ref[...] += jnp.dot(
        x_ref[...].astype(w_ref.dtype), w_ref[...], preferred_element_type=jnp.float32
    )

    @pl.when(kk == pl.num_programs(2) - 1)
    def _():
        out = acc_ref[...]
        if has_bias:
            out = out + b_ref[...].astype(jnp.float32)
        if has_res:
            out = out + r_ref[...].astype(jnp.float32)
        o_ref[...] = out.astype(o_ref.dtype)


def matmul(x, w, bias=None, residual=None, out_dtype=jnp.float32,
           tm=1024, tn=512, tk=512):
    """y = x @ w (+ bias) (+ residual), tiled over (M, N, K) with an f32 accumulator."""
    M0, K = x.shape
    N = w.shape[1]
    M = _round_up(M0, 8)
    x = _pad_rows(x, M)
    if residual is not None:
        residual = _pad_rows(residual, M)
    tm, tn, tk = _pick_tile(M, tm), _pick_tile(N, tn), _pick_tile(K, tk)

    in_specs = [pl.BlockSpec((tm, tk), lambda i, j, k: (i, k)),
                pl.BlockSpec((tk, tn), lambda i, j, k: (k, j))]
    args = [x, w]
    if bias is not None:
        in_specs.append(pl.BlockSpec((1, tn), lambda i, j, k: (0, j)))
        args.append(bias)
    if residual is not None:
        in_specs.append(pl.BlockSpec((tm, tn), lambda i, j, k: (i, j)))
        args.append(residual)

    kernel = functools.partial(_matmul_kernel,
                               has_bias=bias is not None, has_res=residual is not None)
    out = pl.pallas_call(
        kernel,
        out_shape=jax.ShapeDtypeStruct((M, N), out_dtype),
        grid=(M // tm, N // tn, K // tk),
        in_specs=in_specs,
        out_specs=pl.BlockSpec((tm, tn), lambda i, j, k: (i, j)),
        scratch_shapes=[pltpu.VMEM((tm, tn), jnp.float32)],
        compiler_params=pltpu.CompilerParams(
            dimension_semantics=("parallel", "parallel", "arbitrary"),
            vmem_limit_bytes=_vmem_limit_bytes()),
    )(*args)
    return out if M == M0 else out[:M0]


# -------------------------- fused MLP gate/up + activation ---------------------------
def _gate_up_kernel(x_ref, wg_ref, wu_ref, o_ref, accg_ref, accu_ref):
    kk = pl.program_id(2)

    @pl.when(kk == 0)
    def _():
        accg_ref[...] = jnp.zeros_like(accg_ref)
        accu_ref[...] = jnp.zeros_like(accu_ref)

    x = x_ref[...].astype(wg_ref.dtype)
    accg_ref[...] += jnp.dot(x, wg_ref[...], preferred_element_type=jnp.float32)
    accu_ref[...] += jnp.dot(x, wu_ref[...], preferred_element_type=jnp.float32)

    @pl.when(kk == pl.num_programs(2) - 1)
    def _():
        o_ref[...] = (_gelu_tanh(accg_ref[...]) * accu_ref[...]).astype(o_ref.dtype)


def gate_up(x, wg, wu, tm=1024, tn=512, tk=512):
    M0, K = x.shape
    I = wg.shape[1]
    M = _round_up(M0, 8)
    x = _pad_rows(x, M)
    tm, tn, tk = _pick_tile(M, tm), _pick_tile(I, tn), _pick_tile(K, tk)
    out = pl.pallas_call(
        _gate_up_kernel,
        out_shape=jax.ShapeDtypeStruct((M, I), jnp.bfloat16),
        grid=(M // tm, I // tn, K // tk),
        in_specs=[pl.BlockSpec((tm, tk), lambda i, j, k: (i, k)),
                  pl.BlockSpec((tk, tn), lambda i, j, k: (k, j)),
                  pl.BlockSpec((tk, tn), lambda i, j, k: (k, j))],
        out_specs=pl.BlockSpec((tm, tn), lambda i, j, k: (i, j)),
        scratch_shapes=[pltpu.VMEM((tm, tn), jnp.float32),
                        pltpu.VMEM((tm, tn), jnp.float32)],
        compiler_params=pltpu.CompilerParams(
            dimension_semantics=("parallel", "parallel", "arbitrary"),
            vmem_limit_bytes=_vmem_limit_bytes()),
    )(x, wg, wu)
    return out if M == M0 else out[:M0]


# --------------------------------- RMSNorm kernel -------------------------------------
def _rmsnorm_kernel(x_ref, w_ref, o_ref, *, eps):
    x = x_ref[...].astype(jnp.float32)
    var = jnp.mean(x * x, axis=-1, keepdims=True)
    y = x * jax.lax.rsqrt(var + eps) * (1.0 + w_ref[...].astype(jnp.float32))
    o_ref[...] = y.astype(o_ref.dtype)


def rmsnorm(x, w, eps, out_dtype=jnp.bfloat16, tm=512):
    M, H = x.shape
    tm = _pick_tile(M, tm)
    return pl.pallas_call(
        functools.partial(_rmsnorm_kernel, eps=eps),
        out_shape=jax.ShapeDtypeStruct((M, H), out_dtype),
        grid=(M // tm,),
        in_specs=[pl.BlockSpec((tm, H), lambda i: (i, 0)),
                  pl.BlockSpec((1, H), lambda i: (0, 0))],
        out_specs=pl.BlockSpec((tm, H), lambda i: (i, 0)),
        compiler_params=pltpu.CompilerParams(dimension_semantics=("parallel",)),
    )(x, w)


# --------------------- vision tower post: pos-embed add + layernorm -------------------
def _vision_post_kernel(x_ref, pos_ref, g_ref, b_ref, o_ref):
    x = x_ref[0] + pos_ref[...]
    mu = jnp.mean(x, axis=-1, keepdims=True)
    var = jnp.mean((x - mu) ** 2, axis=-1, keepdims=True)
    y = (x - mu) * jax.lax.rsqrt(var + 1e-6) * g_ref[...] + b_ref[...]
    o_ref[0] = y.astype(o_ref.dtype)


def vision_post(x, pos, g, b):
    B, P, D = x.shape
    return pl.pallas_call(
        _vision_post_kernel,
        out_shape=jax.ShapeDtypeStruct((B, P, D), jnp.bfloat16),
        grid=(B,),
        in_specs=[pl.BlockSpec((1, P, D), lambda i: (i, 0, 0)),
                  pl.BlockSpec((P, D), lambda i: (0, 0)),
                  pl.BlockSpec((1, D), lambda i: (0, 0)),
                  pl.BlockSpec((1, D), lambda i: (0, 0))],
        out_specs=pl.BlockSpec((1, P, D), lambda i: (i, 0, 0)),
        compiler_params=pltpu.CompilerParams(dimension_semantics=("parallel",)),
    )(x, pos, g, b)


# ------------------------------- RoPE pre-rotation kernel ------------------------------
def _rope_kernel(x_ref, c_ref, s_ref, o_ref, *, half):
    x = x_ref[0].astype(jnp.float32)
    o_ref[0] = (x * c_ref[0] + _rotate_roll(x, half) * s_ref[0]).astype(o_ref.dtype)


def apply_rope(x, cos, sin_signed, nheads):
    """x: (B*nheads, S, hd) bf16; cos/sin_signed: (B, S, hd) f32.

    rotate_half's sign is folded into sin_signed; any extra per-query scaling (e.g.
    1/sqrt(hd)) can be folded into the cos/sin tables by the caller.
    """
    BH, S, hd = x.shape
    ts = _pick_tile(S, 512)
    half = hd // 2

    def x_map(i, j):
        return (i, j, 0)

    def tbl_map(i, j):
        return (i // nheads, j, 0)

    return pl.pallas_call(
        functools.partial(_rope_kernel, half=half),
        out_shape=jax.ShapeDtypeStruct((BH, S, hd), jnp.bfloat16),
        grid=(BH, S // ts),
        in_specs=[pl.BlockSpec((1, ts, hd), x_map),
                  pl.BlockSpec((1, ts, hd), tbl_map),
                  pl.BlockSpec((1, ts, hd), tbl_map)],
        out_specs=pl.BlockSpec((1, ts, hd), x_map),
        compiler_params=pltpu.CompilerParams(
            dimension_semantics=("parallel", "parallel")),
    )(x, cos, sin_signed)


# ------------------- flash-style attention (RoPE + scale pre-applied) ------------------
def _attn_kernel(q_ref, k_ref, v_ref, o_ref, m_sc, l_sc, acc_sc):
    kv = pl.program_id(2)

    @pl.when(kv == 0)
    def _():
        m_sc[...] = jnp.full_like(m_sc, -jnp.inf)
        l_sc[...] = jnp.zeros_like(l_sc)
        acc_sc[...] = jnp.zeros_like(acc_sc)

    q = q_ref[0]                            # (tq, hd) bf16, RoPE + 1/sqrt(hd) already applied
    k = k_ref[0]                            # (tk, hd) bf16, RoPE already applied
    v = v_ref[0]                            # (tk, hd) bf16

    # scores in NT form (no materialized k.T); bf16 MXU inputs, f32 accumulation.
    s = jax.lax.dot_general(q, k, (((1,), (1,)), ((), ())),
                            preferred_element_type=jnp.float32)
    # prefill additive attention mask is identically zero (reference builds zeros) -> omitted.

    m_prev = m_sc[...]
    m_new = jnp.maximum(m_prev, s.max(axis=-1, keepdims=True))
    alpha = jnp.exp(m_prev - m_new)
    p = jnp.exp(s - m_new)                  # f32 softmax numerics
    l_sc[...] = alpha * l_sc[...] + p.sum(axis=-1, keepdims=True)
    acc_sc[...] = alpha * acc_sc[...] + jax.lax.dot_general(
        p.astype(jnp.bfloat16), v, (((1,), (0,)), ((), ())),
        preferred_element_type=jnp.float32)
    m_sc[...] = m_new

    @pl.when(kv == pl.num_programs(2) - 1)
    def _():
        # exact per-row reciprocal (not the approx EUP path) for reference-matching numerics.
        o_ref[0] = (acc_sc[...] * (1.0 / l_sc[...])).astype(o_ref.dtype)


def flash_attention(q, k, v):
    """q: (G, Sq, hd); k, v: (G, Skv, hd) — bf16, G = B*num_kv_heads, Sq = n_rep*S.

    The GQA group is folded into the query-row dimension, so each K/V tile is streamed
    once per kv head (not once per q head). Q is tiled to bound VMEM (v7x: 64 MiB).
    """
    G, Sq, hd = q.shape
    Skv = k.shape[1]
    tq = _pick_tile(Sq, 512)
    tk = _pick_tile(Skv, 512)
    return pl.pallas_call(
        _attn_kernel,
        out_shape=jax.ShapeDtypeStruct((G, Sq, hd), jnp.bfloat16),
        grid=(G, Sq // tq, Skv // tk),
        in_specs=[pl.BlockSpec((1, tq, hd), lambda i, qi, kv: (i, qi, 0)),
                  pl.BlockSpec((1, tk, hd), lambda i, qi, kv: (i, kv, 0)),
                  pl.BlockSpec((1, tk, hd), lambda i, qi, kv: (i, kv, 0))],
        out_specs=pl.BlockSpec((1, tq, hd), lambda i, qi, kv: (i, qi, 0)),
        scratch_shapes=[pltpu.VMEM((tq, 1), jnp.float32),
                        pltpu.VMEM((tq, 1), jnp.float32),
                        pltpu.VMEM((tq, hd), jnp.float32)],
        compiler_params=pltpu.CompilerParams(
            dimension_semantics=("parallel", "parallel", "arbitrary"),
            vmem_limit_bytes=_vmem_limit_bytes()),
    )(q, k, v)


# -------------------------------- parameter init --------------------------------------
def init_params(key, cfg):
    H, V, hd = cfg["hidden"], cfg["vocab_size"], cfg["head_dim"]
    Dv, C, p = cfg["vision_hidden"], cfg["channels"], cfg["patch_size"]
    P = (cfg["image_size"] // p) ** 2
    I = cfg["intermediate"]
    nqh = cfg["num_heads"] * hd
    nkvh = cfg["num_kv_heads"] * hd
    bf = jnp.bfloat16
    # pad vocab so the lm_head N tile never degenerates to 128 (real V=257152 -> 257536).
    V_pad = V if V <= 512 else _round_up(V, 512)

    keys = iter(jax.random.split(key, 10 + 7 * cfg["num_layers"]))

    def nrm(shape, s=0.02, dtype=jnp.float32):
        return (s * jax.random.normal(next(keys), shape, jnp.float32)).astype(dtype)

    params = {
        "embed": nrm((V, H)),
        "patch_w": nrm((C * p * p, Dv), dtype=bf),
        "patch_b": nrm((1, Dv)),
        "vis_pos": nrm((P, Dv)),
        "vis_ln_g": 1.0 + nrm((1, Dv), 0.01),
        "vis_ln_b": nrm((1, Dv)),
        "proj_w": nrm((Dv, H), dtype=bf),
        "proj_b": nrm((1, H)),
        "final_ln": nrm((1, H), 0.1),
        "lm_head": nrm((H, V_pad), dtype=bf),
        "layers": [],
    }
    for _ in range(cfg["num_layers"]):
        params["layers"].append({
            "ln1": nrm((1, H), 0.1),
            "wqkv": nrm((H, nqh + 2 * nkvh), dtype=bf),   # fused q/k/v projection
            "wo": nrm((nqh, H), dtype=bf),
            "ln2": nrm((1, H), 0.1),
            "wg": nrm((H, I), dtype=bf),
            "wu": nrm((H, I), dtype=bf),
            "wd": nrm((I, H), dtype=bf),
        })
    return params


# -------------------------------- full forward pass -----------------------------------
def paligemma_forward(params, input_ids, pixel_values, attention_mask, cfg):
    H, hd = cfg["hidden"], cfg["head_dim"]
    nq, nkv = cfg["num_heads"], cfg["num_kv_heads"]
    n_rep = nq // nkv
    nqh, nkvh = nq * hd, nkv * hd
    eps = cfg["rms_eps"]
    B, S = input_ids.shape
    M = B * S
    V = cfg["vocab_size"]

    # token embeddings (gather: glue)
    input_embeds = jnp.take(params["embed"], input_ids, axis=0)  # (B, S, H) f32

    # --- vision tower: patch embedding + pos-embed + layernorm ---
    # TODO(synk): SiglipVisionModel transformer encoder layers are not defined in the
    # reference source; the vision tower here is patch-embed + pos-embed + layernorm only.
    pch, C = cfg["patch_size"], cfg["channels"]
    _, _, Him, Wim = pixel_values.shape
    nph, npw = Him // pch, Wim // pch
    P = nph * npw
    x = pixel_values.astype(jnp.float32)
    x = x.reshape(B, C, nph, pch, npw, pch)
    x = jnp.transpose(x, (0, 2, 4, 1, 3, 5)).reshape(B * P, C * pch * pch)
    vis = matmul(x.astype(jnp.bfloat16), params["patch_w"], bias=params["patch_b"],
                 out_dtype=jnp.float32).reshape(B, P, -1)
    vis = vision_post(vis, params["vis_pos"], params["vis_ln_g"], params["vis_ln_b"])  # bf16

    # --- multimodal projector ---
    img_features = matmul(vis.reshape(B * P, -1), params["proj_w"],
                          bias=params["proj_b"], out_dtype=jnp.float32).reshape(B, P, H)

    # --- merge image features into text embeddings (masked_scatter semantics) ---
    scaled_img = img_features / math.sqrt(float(H))
    text_mask = (input_ids != cfg["image_token_index"]) & (input_ids != cfg["pad_token_id"])
    image_mask = input_ids == cfg["image_token_index"]
    pad_mask = input_ids == cfg["pad_token_id"]
    final = jnp.where(text_mask[..., None], input_embeds, 0.0)
    img_pos = jnp.clip(jnp.cumsum(image_mask.astype(jnp.int32), axis=-1) - 1, 0, P - 1)
    gathered = jnp.take_along_axis(
        scaled_img, jnp.broadcast_to(img_pos[..., None], (B, S, H)), axis=1)
    final = jnp.where(image_mask[..., None], gathered, final)
    final = jnp.where(pad_mask[..., None], 0.0, final)

    # prefill path (kv_cache is None): the reference builds an all-zero additive causal
    # mask -> dropped from the attention kernel; position ids = cumsum(attention_mask).
    position_ids = jnp.where(
        attention_mask == 0, 1, jnp.cumsum(attention_mask.astype(jnp.int32), axis=-1))

    # rotary tables (GemmaRotaryEmbedding); rotate_half sign folded into sin so the rope
    # kernel only needs a lane roll; 1/sqrt(hd) score scale folded into the Q tables.
    half = hd // 2
    scale = 1.0 / math.sqrt(hd)
    inv_freq = 1.0 / (cfg["rope_theta"] ** (jnp.arange(0, hd, 2, dtype=jnp.float32) / hd))
    freqs = position_ids[:, :, None].astype(jnp.float32) * inv_freq[None, None, :]
    emb = jnp.concatenate([freqs, freqs], axis=-1)  # (B, S, hd)
    cos = jnp.cos(emb)
    sign = jnp.concatenate([-jnp.ones((half,), jnp.float32), jnp.ones((half,), jnp.float32)])
    sin_signed = jnp.sin(emb) * sign
    cos_q, sin_q = cos * scale, sin_signed * scale

    # --- Gemma language model (bf16 residual stream, f32 accumulation inside kernels) ---
    h = (final * math.sqrt(float(H))).reshape(M, H).astype(jnp.bfloat16)
    for lw in params["layers"]:
        # attention block
        xn = rmsnorm(h, lw["ln1"], eps)                                  # (M, H) bf16
        qkv = matmul(xn, lw["wqkv"], out_dtype=jnp.bfloat16)             # (M, nqh + 2 nkvh)
        q = qkv[:, :nqh].reshape(B, S, nq, hd).transpose(0, 2, 1, 3).reshape(B * nq, S, hd)
        k = qkv[:, nqh:nqh + nkvh].reshape(B, S, nkv, hd).transpose(0, 2, 1, 3)
        k = k.reshape(B * nkv, S, hd)
        v = qkv[:, nqh + nkvh:].reshape(B, S, nkv, hd).transpose(0, 2, 1, 3)
        v = v.reshape(B * nkv, S, hd)
        q = apply_rope(q, cos_q, sin_q, nq)       # RoPE + score scale, once per q head
        k = apply_rope(k, cos, sin_signed, nkv)   # RoPE once per kv head (not per q head)
        # fold the GQA group into the query rows so each K/V tile is streamed once per group
        q = q.reshape(B * nkv, n_rep * S, hd)
        attn = flash_attention(q, k, v)                                  # (B*nkv, n_rep*S, hd)
        attn = attn.reshape(B, nkv, n_rep, S, hd).transpose(0, 3, 1, 2, 4).reshape(M, nqh)
        h = matmul(attn, lw["wo"], residual=h, out_dtype=jnp.bfloat16)   # fused residual add

        # MLP block
        xn2 = rmsnorm(h, lw["ln2"], eps)
        act = gate_up(xn2, lw["wg"], lw["wu"])                           # gelu(gate) * up
        h = matmul(act, lw["wd"], residual=h, out_dtype=jnp.bfloat16)    # fused residual add

    hn = rmsnorm(h, params["final_ln"], eps)
    logits = matmul(hn, params["lm_head"], out_dtype=jnp.float32)        # (M, V_pad) f32
    logits = logits[:, :V].reshape(B, S, V)
    return {"logits": logits}


# --------------------------------------- main -----------------------------------------
if __name__ == "__main__":
    cfg = dict(
        vocab_size=128,
        hidden=32,
        intermediate=64,
        num_layers=2,
        num_heads=4,
        num_kv_heads=2,
        head_dim=16,
        rms_eps=1e-6,
        rope_theta=10000.0,
        image_size=16,
        patch_size=8,
        channels=3,
        vision_hidden=24,
        image_token_index=127,
        pad_token_id=-1,
    )
    B, S = 2, 8
    P = (cfg["image_size"] // cfg["patch_size"]) ** 2  # 4 image tokens

    key = jax.random.PRNGKey(0)
    kp, kpix, ktok = jax.random.split(key, 3)
    params = init_params(kp, cfg)

    pixel_values = jax.random.normal(
        kpix, (B, cfg["channels"], cfg["image_size"], cfg["image_size"]), jnp.float32)
    text_ids = jax.random.randint(ktok, (B, S - P), 0, cfg["vocab_size"] - 1)
    image_ids = jnp.full((B, P), cfg["image_token_index"], jnp.int32)
    input_ids = jnp.concatenate([image_ids, text_ids.astype(jnp.int32)], axis=-1)  # (B, S)
    attention_mask = jnp.ones((B, S), jnp.int32)  # "input cannot be padded"

    out = paligemma_forward(params, input_ids, pixel_values, attention_mask, cfg)
    logits = jax.block_until_ready(out["logits"])
    assert logits.shape == (B, S, cfg["vocab_size"])
    assert logits.dtype == jnp.float32
    assert bool(jnp.all(jnp.isfinite(logits)))
    print("KERNEL_OK")
</pallas_src>

<mosaic_0001>
module attributes {stable_mosaic.version = 11 : i64} {
  func.func @_matmul_kernel(%arg0: i32, %arg1: i32, %arg2: i32, %arg3: memref<8x192xbf16, #tpu.memory_space<vmem>>, %arg4: memref<192x24xbf16, #tpu.memory_space<vmem>>, %arg5: memref<1x24xf32, #tpu.memory_space<vmem>>, %arg6: memref<8x24xf32, #tpu.memory_space<vmem>>, %arg7: memref<8x24xf32, #tpu.memory_space<vmem>>) attributes {dimension_semantics = [#tpu.dimension_semantics<parallel>, #tpu.dimension_semantics<parallel>, #tpu.dimension_semantics<arbitrary>], iteration_bounds = array<i64: 1, 1, 1>, scalar_prefetch = 0 : i64, scratch_operands = 1 : i64, tpu.core_type = #tpu.core_type<tc>, window_params = [{transform_indices = @transform_0, window_bounds = array<i64: 8, 192>}, {transform_indices = @transform_1, window_bounds = array<i64: 192, 24>}, {transform_indices = @transform_2, window_bounds = array<i64: 1, 24>}, {transform_indices = @transform_3, window_bounds = array<i64: 8, 24>}]} {
    %c0_i32 = arith.constant 0 : i32
    %0 = arith.cmpi eq, %arg2, %c0_i32 : i32
    %1 = arith.extui %0 : i1 to i32
    %c0_i32_0 = arith.constant 0 : i32
    %2 = arith.cmpi ne, %1, %c0_i32_0 : i32
    scf.if %2 {
      %cst_10 = arith.constant 0.000000e+00 : f32
      %12 = vector.broadcast %cst_10 : f32 to vector<8x24xf32>
      %c0_11 = arith.constant 0 : index
      %c0_12 = arith.constant 0 : index
      %13 = vector.load %arg7[%c0_11, %c0_12] : memref<8x24xf32, #tpu.memory_space<vmem>>, vector<8x24xf32>
      tpu.vector_store %arg7[%c0_11, %c0_12], %12 {strides = array<i32>} : memref<8x24xf32, #tpu.memory_space<vmem>>, vector<8x24xf32>,
    } else {
    }
    %c0 = arith.constant 0 : index
    %c0_1 = arith.constant 0 : index
    %3 = vector.load %arg7[%c0, %c0_1] : memref<8x24xf32, #tpu.memory_space<vmem>>, vector<8x24xf32>
    %c0_2 = arith.constant 0 : index
    %c0_3 = arith.constant 0 : index
    %4 = vector.load %arg3[%c0_2, %c0_3] : memref<8x192xbf16, #tpu.memory_space<vmem>>, vector<8x192xbf16>
    %c0_4 = arith.constant 0 : index
    %c0_5 = arith.constant 0 : index
    %5 = vector.load %arg4[%c0_4, %c0_5] : memref<192x24xbf16, #tpu.memory_space<vmem>>, vector<192x24xbf16>
    %cst = arith.constant dense<0.000000e+00> : vector<8x24xf32>
    %6 = tpu.matmul %4, %5, %cst {dimension_numbers = #tpu.dot_dimension_numbers<[1], [0], [0], [1], [0, 0, 1, 1], [], []>} : vector<8x192xbf16>, vector<192x24xbf16>, vector<8x24xf32> -> vector<8x24xf32>
    %7 = arith.addf %3, %6 : vector<8x24xf32>
    %c0_6 = arith.constant 0 : index
    %c0_7 = arith.constant 0 : index
    %8 = vector.load %arg7[%c0_6, %c0_7] : memref<8x24xf32, #tpu.memory_space<vmem>>, vector<8x24xf32>
    tpu.vector_store %arg7[%c0_6, %c0_7], %7 {strides = array<i32>} : memref<8x24xf32, #tpu.memory_space<vmem>>, vector<8x24xf32>,
    %c0_i32_8 = arith.constant 0 : i32
    %9 = arith.cmpi eq, %arg2, %c0_i32_8 : i32
    %10 = arith.extui %9 : i1 to i32
    %c0_i32_9 = arith.constant 0 : i32
    %11 = arith.cmpi ne, %10, %c0_i32_9 : i32
    scf.if %11 {
      %c0_10 = arith.constant 0 : index
      %c0_11 = arith.constant 0 : index
      %12 = vector.load %arg7[%c0_10, %c0_11] : memref<8x24xf32, #tpu.memory_space<vmem>>, vector<8x24xf32>
      %c0_12 = arith.constant 0 : index
      %c0_13 = arith.constant 0 : index
      %13 = vector.load %arg5[%c0_12, %c0_13] : memref<1x24xf32, #tpu.memory_space<vmem>>, vector<1x24xf32>
      %14 = vector.broadcast %13 : vector<1x24xf32> to vector<8x24xf32>
      %15 = arith.addf %12, %14 : vector<8x24xf32>
      %c0_14 = arith.constant 0 : index
      %c0_15 = arith.constant 0 : index
      %16 = vector.load %arg6[%c0_14, %c0_15] : memref<8x24xf32, #tpu.memory_space<vmem>>, vector<8x24xf32>
      tpu.vector_store %arg6[%c0_14, %c0_15], %15 {strides = array<i32>} : memref<8x24xf32, #tpu.memory_space<vmem>>, vector<8x24xf32>,
    } else {
    }
    return
  }
  func.func @transform_0(%arg0: i32, %arg1: i32, %arg2: i32) -> (i32, i32) {
    %c0_i32 = arith.constant 0 : i32
    return %arg0, %arg2 : i32, i32
  }
  func.func @transform_1(%arg0: i32, %arg1: i32, %arg2: i32) -> (i32, i32) {
    %c0_i32 = arith.constant 0 : i32
    return %arg2, %arg1 : i32, i32
  }
  func.func @transform_2(%arg0: i32, %arg1: i32, %arg2: i32) -> (i32, i32) {
    %c0_i32 = arith.constant 0 : i32
    %c0_i32_0 = arith.constant 0 : i32
    return %c0_i32, %arg1 : i32, i32
  }
  func.func @transform_3(%arg0: i32, %arg1: i32, %arg2: i32) -> (i32, i32) {
    %c0_i32 = arith.constant 0 : i32
    return %arg0, %arg1 : i32, i32
  }
}

</mosaic_0001>

<llo_original>
// kernel: tpu_custom_call.1
$region0: #{tpu_custom_call.1}
  #allocation0 [shape = 'u32[]', space=smem, size = 0x4, offset = 0x4, fixed_abs, tag = 'smem constant byte address 0x4 - core index']
  #allocation1 [shape = 'u32[144,128]{1,0:T(1,128)}', space=vmem, size = 0x12000, scoped, tag = 'internal scratch']
  #allocation2 [shape = 'f32[8,24]{1,0:T(8,128)}', space=vmem, size = 0x1000, scoped, tag = 'scratch operand']
  %s0 = inlined_call_operand.hbm [shape: bf16[8,192], index: 0, kind: input, shape index: {}]
  %s1 = inlined_call_operand.hbm [shape: bf16[192,24], index: 1, kind: input, shape index: {}]
  %s2 = inlined_call_operand.hbm [shape: f32[1,24], index: 2, kind: input, shape index: {}]
  %s3 = inlined_call_operand.hbm [shape: f32[8,24], index: 3, kind: output, shape index: {}]
  %s4 = sld [smem:[#allocation0]]
  $region42: #{tpu_custom_call.1} parent=0
    _
  %s6 = ssub.s32 1, %s4
  %s7 = scalar_select 0, %s6, %s4
  $region1: #{tpu_custom_call.1} parent=0
    #allocation3 [shape = 'u8[4096]{0}', space=vmem, size = 0x1000, scoped, tag = 'input window, operand 0, single buffered']
    #allocation4 [shape = 's32[1]{0}', space=sflag, size = 0x4, scoped, tag = 'scoped memory for tpu_custom_call.1']
    #allocation5 [shape = 's32[1]{0}', space=sflag, size = 0x4, scoped, tag = 'scoped memory for tpu_custom_call.1']
    #allocation6 [shape = 'u8[49152]{0}', space=vmem, size = 0xc000, scoped, tag = 'input window, operand 1, single buffered']
    #allocation7 [shape = 's32[1]{0}', space=sflag, size = 0x4, scoped, tag = 'scoped memory for tpu_custom_call.1']
    #allocation8 [shape = 'u8[512]{0}', space=vmem, size = 0x400, scoped, tag = 'input window, operand 2, single buffered']
    #allocation9 [shape = 'u8[4096]{0}', space=vmem, size = 0x1000, scoped, tag = 'output window, operand 0, single buffered']
    %8 = vsyncpa [#allocation4], 0
    %9 = vsyncpa [#allocation7], 0
    %10 = vsyncpa [#allocation5], 0
    // Predicated region
    $region2: #{tpu_custom_call.1} parent=1 // pred_check
      _
    $region3: #{tpu_custom_call.1} parent=1 // pred_check_branch
      %12 = sbr.rel (0) target = $region5
    $region4: #{tpu_custom_call.1} parent=1 // pred_region
      %s14 = ssub.s32 128, 128
      %15 = vsyncadd [#allocation4], %s14
      %s17 = sshll.u32 [#allocation3], 4
      %s18 = int_to_ptr.vmem [resolvable:$true] %s17
      %20 = dma.hbm_to_vmem [thread:$0]  %s0, 128, %s18, [#allocation4]
    $region5: #{tpu_custom_call.1} parent=1 // pred_fallthru
      _
    // Predicated region
    $region6: #{tpu_custom_call.1} parent=1 // pred_check
      _
    $region7: #{tpu_custom_call.1} parent=1 // pred_check_branch
      %22 = sbr.rel (0) target = $region9
    $region8: #{tpu_custom_call.1} parent=1 // pred_region
      %s24 = ssub.s32 1536, 1536
      %25 = vsyncadd [#allocation7], %s24
      %s26 = sshll.u32 [#allocation6], 4
      %s27 = int_to_ptr.vmem [resolvable:$true] %s26
      %32 = dma.hbm_to_vmem [thread:$0]  %s1, 1536, %s27, [#allocation7], 64, 64, 4
    $region9: #{tpu_custom_call.1} parent=1 // pred_fallthru
      _
    // Predicated region
    $region10: #{tpu_custom_call.1} parent=1 // pred_check
      _
    $region11: #{tpu_custom_call.1} parent=1 // pred_check_branch
      %34 = sbr.rel (0) target = $region13
    $region12: #{tpu_custom_call.1} parent=1 // pred_region
      %s36 = ssub.s32 16, 16
      %37 = vsyncadd [#allocation7], %s36
      %s39 = sshll.u32 [#allocation8], 4
      %s40 = int_to_ptr.vmem [resolvable:$true] %s39
      %42 = dma.hbm_to_vmem [thread:$0]  %s2, 16, %s40, [#allocation7]
    $region13: #{tpu_custom_call.1} parent=1 // pred_fallthru
      _
    // Predicated region
    $region14: #{tpu_custom_call.1} parent=1 // pred_check
      _
    $region15: #{tpu_custom_call.1} parent=1 // pred_check_branch
      %44 = sbr.rel (0) target = $region17
    $region16: #{tpu_custom_call.1} parent=1 // pred_region
      %45 = dma.done [#allocation4], 128
    $region17: #{tpu_custom_call.1} parent=1 // pred_fallthru
      _
    // Predicated region
    $region18: #{tpu_custom_call.1} parent=1 // pred_check
      _
    $region19: #{tpu_custom_call.1} parent=1 // pred_check_branch
      %47 = sbr.rel (0) target = $region21
    $region20: #{tpu_custom_call.1} parent=1 // pred_region
      %48 = dma.done [#allocation7], 1536
    $region21: #{tpu_custom_call.1} parent=1 // pred_fallthru
      _
    // Predicated region
    $region22: #{tpu_custom_call.1} parent=1 // pred_check
      _
    $region23: #{tpu_custom_call.1} parent=1 // pred_check_branch
      %50 = sbr.rel (0) target = $region25
    $region24: #{tpu_custom_call.1} parent=1 // pred_region
      %51 = dma.done [#allocation7], 16
    $region25: #{tpu_custom_call.1} parent=1 // pred_fallthru
      _
    %p53 = scmp.eq.s32.totalorder 0, 0
    // Predicated region
    $region26: #{tpu_custom_call.1} parent=1 // pred_check
      %p54 = pneg %p53
    $region27: #{tpu_custom_call.1} parent=1 // pred_check_branch
      %56 = sbr.rel (%p54) target = $region29
    $region28: #{tpu_custom_call.1} parent=1 // pred_region
      %vm57 = vcmask 195584
      %58 = vst.msk [vmem:[#allocation2] sm:$0xff] %vm57, 0.0
    $region29: #{tpu_custom_call.1} parent=1 // pred_fallthru
      _
    %v59 = vld [vmem:[#allocation2] sm:$0xff]
    %v60 = vld [vmem:[#allocation3] sm:$0xff]
    %v61 = vld [vmem:[#allocation6] sm:$0xf]
    %v62 = vld [vmem:[#allocation6 + $0x4] sm:$0xf]
    %v63 = vld [vmem:[#allocation6 + $0x8] sm:$0xf]
    %v64 = vld [vmem:[#allocation6 + $0xc] sm:$0xf]
    %v65 = vld [vmem:[#allocation6 + $0x10] sm:$0xf]
    %v66 = vld [vmem:[#allocation6 + $0x14] sm:$0xf]
    %v67 = vld [vmem:[#allocation6 + $0x18] sm:$0xf]
    %v68 = vld [vmem:[#allocation6 + $0x1c] sm:$0xf]
    %v69 = vld [vmem:[#allocation6 + $0x20] sm:$0xf]
    %v70 = vld [vmem:[#allocation6 + $0x24] sm:$0xf]
    %v71 = vld [vmem:[#allocation6 + $0x28] sm:$0xf]
    %v72 = vld [vmem:[#allocation6 + $0x2c] sm:$0xf]
    %v73 = vld [vmem:[#allocation6 + $0x30] sm:$0xf]
    %v74 = vld [vmem:[#allocation6 + $0x34] sm:$0xf]
    %v75 = vld [vmem:[#allocation6 + $0x38] sm:$0xf]
    %v76 = vld [vmem:[#allocation6 + $0x3c] sm:$0xf]
    %v77 = vld [vmem:[#allocation6 + $0x40] sm:$0xf]
    %v78 = vld [vmem:[#allocation6 + $0x44] sm:$0xf]
    %v79 = vld [vmem:[#allocation6 + $0x48] sm:$0xf]
    %v80 = vld [vmem:[#allocation6 + $0x4c] sm:$0xf]
    %v81 = vld [vmem:[#allocation6 + $0x50] sm:$0xf]
    %v82 = vld [vmem:[#allocation6 + $0x54] sm:$0xf]
    %v83 = vld [vmem:[#allocation6 + $0x58] sm:$0xf]
    %v84 = vld [vmem:[#allocation6 + $0x5c] sm:$0xf]
    %v86 = vunpack.c.l.b16 %v60
    %v87 = vunpack.c.h.b16 %v60
    %v88 = vpack.c.b16 %v86, %v86
    %v89 = vpack.c.b16 %v87, %v87
    %v115 = vunpack.c.l.b16 %v61
    %v116 = vunpack.c.l.b16 %v62
    %v117 = vunpack.c.l.b16 %v63
    %v118 = vunpack.c.l.b16 %v64
    %v119 = vunpack.c.l.b16 %v65
    %v120 = vunpack.c.l.b16 %v66
    %v121 = vunpack.c.l.b16 %v67
    %v122 = vunpack.c.l.b16 %v68
    %v123 = vunpack.c.l.b16 %v69
    %v124 = vunpack.c.l.b16 %v70
    %v125 = vunpack.c.l.b16 %v71
    %v126 = vunpack.c.l.b16 %v72
    %v127 = vunpack.c.l.b16 %v73
    %v128 = vunpack.c.l.b16 %v74
    %v129 = vunpack.c.l.b16 %v75
    %v130 = vunpack.c.l.b16 %v76
    %v131 = vunpack.c.l.b16 %v77
    %v132 = vunpack.c.l.b16 %v78
    %v133 = vunpack.c.l.b16 %v79
    %v134 = vunpack.c.l.b16 %v80
    %v135 = vunpack.c.l.b16 %v81
    %v136 = vunpack.c.l.b16 %v82
    %v137 = vunpack.c.l.b16 %v83
    %v138 = vunpack.c.l.b16 %v84
    %v139 = vpack.c.b16 %v116, %v115
    %v140 = vpack.c.b16 %v118, %v117
    %v141 = vpack.c.b16 %v120, %v119
    %v142 = vpack.c.b16 %v122, %v121
    %v143 = vpack.c.b16 %v124, %v123
    %v144 = vpack.c.b16 %v126, %v125
    %v145 = vpack.c.b16 %v128, %v127
    %v146 = vpack.c.b16 %v130, %v129
    %v147 = vpack.c.b16 %v132, %v131
    %v148 = vpack.c.b16 %v134, %v133
    %v149 = vpack.c.b16 %v136, %v135
    %v150 = vpack.c.b16 %v138, %v137
    %vm163 = vcmask 523264
    %v165 = vsel %vm163, %v89, 0
    %167 = vmatprep.subr.bf16.mxu0 0
    %168 = vmatpush1.bf16.msra.mxu0 %v139
    %169 = vmatprep.subr.bf16.mxu0 0
    %170 = vmatpush1.bf16.msra.mxu0 %v140
    %171 = vmatprep.subr.bf16.mxu0 0
    %172 = vmatpush1.bf16.msra.mxu0 %v141
    %173 = vmatprep.subr.bf16.mxu0 0
    %174 = vmatpush1.bf16.msra.mxu0 %v142
    %175 = vmatprep.subr.bf16.mxu0 0
    %176 = vmatpush1.bf16.msra.mxu0 %v143
    %177 = vmatprep.subr.bf16.mxu0 0
    %178 = vmatpush1.bf16.msra.mxu0 %v144
    %179 = vmatprep.subr.bf16.mxu0 0
    %180 = vmatpush1.bf16.msra.mxu0 %v145
    %181 = vmatprep.subr.bf16.mxu0 0
    %182 = vmatpush1.bf16.msra.mxu0 %v146
    %183 = vmatprep.subr.bf16.mxu0 0
    %184 = vmatpush1.bf16.msra.mxu0 %v147
    %185 = vmatprep.subr.bf16.mxu0 0
    %186 = vmatpush1.bf16.msra.mxu0 %v148
    %187 = vmatprep.subr.bf16.mxu0 0
    %188 = vmatpush1.bf16.msra.mxu0 %v149
    %189 = vmatprep.subr.bf16.mxu0 0
    %190 = vmatpush1.bf16.msra.mxu0 %v150
    %191 = vmatprep.subr.bf16.mxu0 0
    %192 = vmatpush1.bf16.msra.mxu0 0
    %193 = vmatprep.subr.bf16.mxu0 0
    %194 = vmatpush1.bf16.msra.mxu0 0
    %195 = vmatprep.subr.bf16.mxu0 0
    %196 = vmatpush1.bf16.msra.mxu0 0
    %197 = vmatprep.subr.bf16.mxu0 0
    %198 = vmatpush1.bf16.msra.mxu0 0
    %199 = vmatprep.mubr.bf16.mxu0 %v165
    %200 = vmatmul.mubr.bf16.gmra.mrb[0].mxu0 %v88
    %v201 = vpop.f32.mrb[0].mxu0
    %v202 = vadd.f32 0.0, %v201
    %v203 = vpop.f32.mrb[0].mxu0
    %v204 = vpop.f32.mrb[0].mxu0
    %v205 = vpop.f32.mrb[0].mxu0
    %206 = vdwg.mxu0
    %v207 = vadd.f32 %v59, %v202
    %vm208 = vcmask 195584
    %209 = vst.msk [vmem:[#allocation2] sm:$0xff] %vm208, %v207
    // Predicated region
    $region30: #{tpu_custom_call.1} parent=1 // pred_check
      %p210 = pneg %p53
    $region31: #{tpu_custom_call.1} parent=1 // pred_check_branch
      %212 = sbr.rel (%p210) target = $region33
    $region32: #{tpu_custom_call.1} parent=1 // pred_region
      %v213 = vld [vmem:[#allocation2] sm:$0xff]
      %v214 = vld [vmem:[#allocation8] sm:$0x1]
      %v216 = vlaneseq
      %v217 = vshrl.u32 %v216, 7
      %v218 = vsub.s32 0, %v217
      %v219 = vrot.slane %v214, %v218
      %v221 = vadd.f32 %v213, %v219
      %222 = vst.msk [vmem:[#allocation9] sm:$0xff] %vm208, %v221
    $region33: #{tpu_custom_call.1} parent=1 // pred_fallthru
      _
    // Predicated region
    $region34: #{tpu_custom_call.1} parent=1 // pred_check
      _
    $region35: #{tpu_custom_call.1} parent=1 // pred_check_branch
      %224 = sbr.rel (0) target = $region37
    $region36: #{tpu_custom_call.1} parent=1 // pred_region
      %s226 = ssub.s32 128, 128
      %227 = vsyncadd [#allocation5], %s226
      %s229 = sshll.u32 [#allocation9], 4
      %s230 = int_to_ptr.vmem [resolvable:$true] %s229
      %232 = dma.vmem_to_hbm [thread:$0]  %s230, 128, %s3, [#allocation5]
    $region37: #{tpu_custom_call.1} parent=1 // pred_fallthru
      _
    // Predicated region
    $region38: #{tpu_custom_call.1} parent=1 // pred_check
      _
    $region39: #{tpu_custom_call.1} parent=1 // pred_check_branch
      %234 = sbr.rel (0) target = $region41
    $region40: #{tpu_custom_call.1} parent=1 // pred_region
      %235 = dma.done [#allocation5], 128
    $region41: #{tpu_custom_call.1} parent=1 // pred_fallthru
      _
    %236 = vsyncpa [#allocation4], 1
    %237 = vsyncpa [#allocation7], 1
    %238 = vsyncpa [#allocation5], 1

</llo_original>
